<compile_context>
chip_gen: v7x
topology: tpu7x:2x2x1
jax: 0.10.0
libtpu: 0.0.40
codegen_flags: <defaults>
</compile_context>

<pallas_src>
import jax
import jax.numpy as jnp
from jax import lax
from jax.experimental import pallas as pl
from jax.experimental.pallas import tpu as pltpu


# ----------------------------- Pallas kernel ---------------------------------
def deconv_bn_elu_kernel(p_ref, w_ref, b_ref, o_ref):
    """Fused (W @ patches) + bias/BN + ELU for one image.

    p_ref: (K, M)  bf16   im2col'ed (dilated + padded) input columns, M = OH*OW (lane-dense)
    w_ref: (OC, K) bf16   flipped conv-transpose weight with BatchNorm scale folded in
    b_ref: (OC, 1) f32    conv bias with BatchNorm shift folded in
    o_ref: (OC, M) f32
    """
    acc = jnp.dot(w_ref[...], p_ref[...], preferred_element_type=jnp.float32)
    acc = acc + b_ref[...]
    # ELU(alpha=1): x if x > 0 else exp(x) - 1   (clamp exp arg so unselected lanes don't overflow)
    neg = jnp.exp(jnp.minimum(acc, 0.0)) - 1.0
    o_ref[...] = jnp.where(acc > 0.0, acc, neg)


# ------------------------------- wrapper --------------------------------------
def se_deconv_block_forward(x_nchw, params, mask=None, *, stride=2, padding=1):
    """SEDeconvBlock.forward: ELU(BatchNorm_eval(ConvTranspose2d(x))), with_se=False."""
    del mask  # TODO(synk): with_se=True path (MaskedChannelAttention) not implemented — class not in spec.
    w = params["w"]                      # (IC, OC, KH, KW)  PyTorch ConvTranspose2d weight layout
    b = params["b"]                      # (OC,)
    gamma, beta = params["gamma"], params["beta"]
    mean, var, eps = params["running_mean"], params["running_var"], params["eps"]

    n, ic, h, wd = x_nchw.shape
    _, oc, kh, kw = w.shape
    oh = (h - 1) * stride - 2 * padding + kh
    ow = (wd - 1) * stride - 2 * padding + kw
    k_dim = kh * kw * ic
    m_dim = oh * ow
    assert m_dim % 128 == 0, "OH*OW should be a multiple of 128 for lane-dense output tiles"

    # Fold eval-mode BatchNorm into the GEMM weight & bias (zero kernel cost).
    # TODO(synk): training-mode BatchNorm (batch statistics) not implemented; eval mode only.
    scale = gamma * lax.rsqrt(var + eps)                              # (OC,)
    w_eff = w.astype(jnp.float32) * scale[None, :, None, None]
    b_eff = (b.astype(jnp.float32) - mean) * scale + beta             # (OC,)

    # ConvTranspose2d == stride-1 conv of the flipped kernel over the interior-dilated,
    # edge-padded input. Build (K, M) patch columns per image (M = OH*OW lane-dense).
    pad = kh - 1 - padding
    xd = lax.pad(x_nchw.astype(jnp.float32), jnp.array(0.0, jnp.float32),
                 ((0, 0, 0), (0, 0, 0),
                  (pad, pad, stride - 1), (pad, pad, stride - 1)))    # (N, IC, 2H+3, 2W+3)
    taps = [xd[:, :, ky:ky + oh, kx:kx + ow]                          # each (N, IC, OH, OW)
            for ky in range(kh) for kx in range(kw)]
    patches = jnp.stack(taps, axis=1)                                 # (N, KH*KW, IC, OH, OW)
    patches = patches.reshape(n, k_dim, m_dim).astype(jnp.bfloat16)   # K index = (ky*KW+kx)*IC+ic

    # weight (IC, OC, KH, KW) -> flip spatial -> (OC, KH, KW, IC) -> (OC, K); matches patch K order
    w2d = jnp.transpose(w_eff[:, :, ::-1, ::-1], (1, 2, 3, 0)).reshape(oc, k_dim)
    w2d = w2d.astype(jnp.bfloat16)
    b2d = b_eff.reshape(oc, 1).astype(jnp.float32)

    out = pl.pallas_call(
        deconv_bn_elu_kernel,
        out_shape=jax.ShapeDtypeStruct((n, oc, m_dim), jnp.float32),
        grid=(n,),
        in_specs=[
            pl.BlockSpec((None, k_dim, m_dim), lambda i: (i, 0, 0)),  # per-image patch columns
            pl.BlockSpec((oc, k_dim), lambda i: (0, 0)),              # resident weights
            pl.BlockSpec((oc, 1), lambda i: (0, 0)),                  # resident bias
        ],
        out_specs=pl.BlockSpec((None, oc, m_dim), lambda i: (i, 0, 0)),
        compiler_params=pltpu.CompilerParams(dimension_semantics=("parallel",)),
    )(patches, w2d, b2d)

    # (OC, OH*OW) per image is already NCHW element order -> plain reshape, no transpose.
    return out.reshape(n, oc, oh, ow)


# ------------------------------ params & reference ----------------------------
def make_params(key, in_channels=4, out_channels=8, kernel_size=4):
    kw_, kb_, kg_, kbe_, km_, kv_ = jax.random.split(key, 6)
    w = 0.05 * jax.random.normal(kw_, (in_channels, out_channels, kernel_size, kernel_size),
                                 jnp.float32)
    b = 0.05 * jax.random.normal(kb_, (out_channels,), jnp.float32)
    gamma = 1.0 + 0.1 * jax.random.normal(kg_, (out_channels,), jnp.float32)
    beta = 0.1 * jax.random.normal(kbe_, (out_channels,), jnp.float32)
    running_mean = 0.1 * jax.random.normal(km_, (out_channels,), jnp.float32)
    running_var = 1.0 + 0.1 * jnp.abs(jax.random.normal(kv_, (out_channels,), jnp.float32))
    return {"w": w, "b": b, "gamma": gamma, "beta": beta,
            "running_mean": running_mean, "running_var": running_var,
            "eps": jnp.float32(1e-5)}


def _ref_forward(x, params, *, stride=2, padding=1):
    """Pure-JAX f32 reference: ConvTranspose2d (PyTorch semantics) + eval BatchNorm + ELU."""
    w, b = params["w"], params["b"]
    gamma, beta = params["gamma"], params["beta"]
    mean, var, eps = params["running_mean"], params["running_var"], params["eps"]
    _, _, kh, kw = w.shape
    w_conv = jnp.transpose(w[:, :, ::-1, ::-1], (1, 0, 2, 3))  # (OC, IC, KH, KW), flipped
    y = lax.conv_general_dilated(
        x.astype(jnp.float32), w_conv.astype(jnp.float32),
        window_strides=(1, 1),
        padding=[(kh - 1 - padding, kh - 1 - padding), (kw - 1 - padding, kw - 1 - padding)],
        lhs_dilation=(stride, stride),
        dimension_numbers=("NCHW", "OIHW", "NCHW"))
    y = y + b[None, :, None, None]
    scale = gamma / jnp.sqrt(var + eps)
    y = y * scale[None, :, None, None] + (beta - mean * scale)[None, :, None, None]
    return jnp.where(y > 0.0, y, jnp.exp(jnp.minimum(y, 0.0)) - 1.0)


if __name__ == "__main__":
    key = jax.random.PRNGKey(0)
    key, kx = jax.random.split(key)
    # x: (N=2, C=4, H=16, W=16) NCHW -> output (2, 8, 32, 32)
    x = jax.random.normal(kx, (2, 4, 16, 16), jnp.float32)
    params = make_params(key, in_channels=4, out_channels=8, kernel_size=4)

    fwd = jax.jit(se_deconv_block_forward)
    out = jax.block_until_ready(fwd(x, params))

    ref = _ref_forward(x, params)
    assert out.shape == ref.shape == (2, 8, 32, 32), (out.shape, ref.shape)
    max_err = float(jnp.max(jnp.abs(out - ref)))
    # bf16 MXU operands with f32 accumulation -> loosened tolerance vs the pure-f32 reference.
    assert jnp.allclose(out, ref, rtol=1e-2, atol=1e-2), max_err

    print("KERNEL_OK")
</pallas_src>

<mosaic_0001>
module attributes {stable_mosaic.version = 11 : i64} {
  func.func @deconv_bn_elu_kernel(%arg0: i32, %arg1: memref<1x64x1024xbf16, #tpu.memory_space<vmem>>, %arg2: memref<8x64xbf16, #tpu.memory_space<vmem>>, %arg3: memref<8x1xf32, #tpu.memory_space<vmem>>, %arg4: memref<1x8x1024xf32, #tpu.memory_space<vmem>>) attributes {dimension_semantics = [#tpu.dimension_semantics<parallel>], iteration_bounds = array<i64: 2>, scalar_prefetch = 0 : i64, scratch_operands = 0 : i64, tpu.core_type = #tpu.core_type<tc>, window_params = [{transform_indices = @transform_0, window_bounds = array<i64: 1, 64, 1024>}, {pipeline_mode = #tpu.pipeline_mode<synchronous>, transform_indices = @transform_1, window_bounds = array<i64: 8, 64>}, {pipeline_mode = #tpu.pipeline_mode<synchronous>, transform_indices = @transform_2, window_bounds = array<i64: 8, 1>}, {transform_indices = @transform_3, window_bounds = array<i64: 1, 8, 1024>}]} {
    %c0 = arith.constant 0 : index
    %c0_0 = arith.constant 0 : index
    %0 = vector.load %arg2[%c0, %c0_0] : memref<8x64xbf16, #tpu.memory_space<vmem>>, vector<8x64xbf16>
    %c0_1 = arith.constant 0 : index
    %c0_2 = arith.constant 0 : index
    %c0_3 = arith.constant 0 : index
    %1 = vector.load %arg1[%c0_1, %c0_2, %c0_3] : memref<1x64x1024xbf16, #tpu.memory_space<vmem>>, vector<1x64x1024xbf16>
    %2 = vector.shape_cast %1 : vector<1x64x1024xbf16> to vector<64x1024xbf16>
    %cst = arith.constant dense<0.000000e+00> : vector<8x1024xf32>
    %3 = tpu.matmul %0, %2, %cst {dimension_numbers = #tpu.dot_dimension_numbers<[1], [0], [0], [1], [0, 0, 1, 1], [], []>} : vector<8x64xbf16>, vector<64x1024xbf16>, vector<8x1024xf32> -> vector<8x1024xf32>
    %c0_4 = arith.constant 0 : index
    %c0_5 = arith.constant 0 : index
    %4 = vector.load %arg3[%c0_4, %c0_5] : memref<8x1xf32, #tpu.memory_space<vmem>>, vector<8x1xf32>
    %5 = vector.broadcast %4 : vector<8x1xf32> to vector<8x1024xf32>
    %6 = arith.addf %3, %5 : vector<8x1024xf32>
    %cst_6 = arith.constant 0.000000e+00 : f32
    %7 = vector.broadcast %cst_6 : f32 to vector<8x1024xf32>
    %8 = arith.minimumf %6, %7 : vector<8x1024xf32>
    %9 = math.exp %8 : vector<8x1024xf32>
    %cst_7 = arith.constant 1.000000e+00 : f32
    %10 = vector.broadcast %cst_7 : f32 to vector<8x1024xf32>
    %11 = arith.subf %9, %10 : vector<8x1024xf32>
    %cst_8 = arith.constant 0.000000e+00 : f32
    %12 = vector.broadcast %cst_8 : f32 to vector<8x1024xf32>
    %13 = arith.cmpf ogt, %6, %12 : vector<8x1024xf32>
    %14 = arith.select %13, %6, %11 : vector<8x1024xi1>, vector<8x1024xf32>
    %c0_9 = arith.constant 0 : index
    %c0_10 = arith.constant 0 : index
    %c0_11 = arith.constant 0 : index
    %15 = vector.load %arg4[%c0_9, %c0_10, %c0_11] : memref<1x8x1024xf32, #tpu.memory_space<vmem>>, vector<1x8x1024xf32>
    %16 = vector.shape_cast %15 : vector<1x8x1024xf32> to vector<8x1024xf32>
    %17 = vector.shape_cast %14 : vector<8x1024xf32> to vector<1x8x1024xf32>
    tpu.vector_store %arg4[%c0_9, %c0_10, %c0_11], %17 {strides = array<i32>} : memref<1x8x1024xf32, #tpu.memory_space<vmem>>, vector<1x8x1024xf32>,
    return
  }
  func.func @transform_0(%arg0: i32) -> (i32, i32, i32) {
    %c0_i32 = arith.constant 0 : i32
    %c0_i32_0 = arith.constant 0 : i32
    %c0_i32_1 = arith.constant 0 : i32
    return %arg0, %c0_i32, %c0_i32_0 : i32, i32, i32
  }
  func.func @transform_1(%arg0: i32) -> (i32, i32) {
    %c0_i32 = arith.constant 0 : i32
    %c0_i32_0 = arith.constant 0 : i32
    %c0_i32_1 = arith.constant 0 : i32
    return %c0_i32, %c0_i32_0 : i32, i32
  }
  func.func @transform_2(%arg0: i32) -> (i32, i32) {
    %c0_i32 = arith.constant 0 : i32
    %c0_i32_0 = arith.constant 0 : i32
    %c0_i32_1 = arith.constant 0 : i32
    return %c0_i32, %c0_i32_0 : i32, i32
  }
  func.func @transform_3(%arg0: i32) -> (i32, i32, i32) {
    %c0_i32 = arith.constant 0 : i32
    %c0_i32_0 = arith.constant 0 : i32
    %c0_i32_1 = arith.constant 0 : i32
    return %arg0, %c0_i32, %c0_i32_0 : i32, i32, i32
  }
}

</mosaic_0001>

<llo_original>
// kernel: se_deconv_block_forward.1
$region0: #{se_deconv_block_forward.1}
  #allocation0 [shape = 'u32[]', space=smem, size = 0x4, offset = 0x4, fixed_abs, tag = 'smem constant byte address 0x4 - core index']
  #allocation1 [shape = 'u32[144,128]{1,0:T(1,128)}', space=vmem, size = 0x12000, scoped, tag = 'internal scratch']
  %s0 = inlined_call_operand.vmem [shape: bf16[2,64,1024], index: 0, kind: input, shape index: {}]
  %s1 = inlined_call_operand.vmem [shape: bf16[8,64], index: 1, kind: input, shape index: {}]
  %s2 = inlined_call_operand.vmem [shape: f32[8,1], index: 2, kind: input, shape index: {}]
  %s3 = inlined_call_operand.vmem [shape: f32[2,8,1024], index: 3, kind: output, shape index: {}]
  %s4 = sld [smem:[#allocation0]]
  $region45: #{se_deconv_block_forward.1} parent=0
    _
  %s6 = ssub.s32 1, %s4
  %s7 = scalar_select 0, %s6, %s4
  loop: start=0, step=1, limit=4
  $region2: #{se_deconv_block_forward.1} parent=0 // loop_pre_header
    _
  $region3: #{se_deconv_block_forward.1} parent=0 // loop_header
    %s9 = sphi 0, %s13
    %p10 = scmp.ge.s32.totalorder %s9, 4
    %s19 = sphi 0, %s21
    %s22 = sphi 0, %s19
    %s23 = sphi 0, %s22
    %s39 = sphi 0, %s23
    %s43 = sphi 0, %s43
    %s45 = sphi 0, %s43
    %s46 = sphi 0, %s45
    %s60 = sphi 0, %s46
    %s64 = sphi 0, %s64
    %s66 = sphi 0, %s64
    %s67 = sphi 0, %s66
    %s81 = sphi 0, %s67
    %s87 = sphi 0, %s89
    %s90 = sphi 0, %s87
    %s91 = sphi 0, %s90
    %s107 = sphi 0, %s91
  $region4: #{se_deconv_block_forward.1} parent=0 // loop_header_branch
    %12 = sbr.rel (%p10) target = $region8
  $region5: #{se_deconv_block_forward.1} parent=0 // loop_body
    %s14 = ssub.s32 %s9, 1
    %s15 = ssub.s32 %s9, 2
    %s16 = sadd.s32 %s9, 1
    %s17 = ssub.s32 %s9, %s16
    %p18 = scmp.eq.s32.totalorder %s17, 0
    %s20 = sadd.s32 %s19, 1
    %s21 = scalar_select %p18, %s19, %s20
    %p24 = pneg %p18
    %p25 = scmp.eq.s32.totalorder %s9, 1
    %p26 = por %p24, %p25
    %p27 = scmp.ne.s32.totalorder %s19, %s22
    %p28 = scmp.eq.s32.totalorder %s9, 0
    %p29 = por %p27, %p28
    %p30 = scmp.ne.s32.totalorder %s19, %s22
    %p31 = scmp.eq.s32.totalorder %s14, 1
    %p32 = por %p30, %p31
    %p33 = scmp.ne.s32.totalorder %s22, %s23
    %p34 = scmp.eq.s32.totalorder %s14, 0
    %p35 = por %p33, %p34
    %p36 = scmp.ne.s32.totalorder %s22, %s23
    %p37 = scmp.eq.s32.totalorder %s15, 1
    %p38 = por %p36, %p37
    %p40 = scmp.ne.s32.totalorder %s23, %s39
    %p41 = scmp.eq.s32.totalorder %s15, 0
    %p42 = por %p40, %p41
    %s44 = sadd.s32 %s43, 1
    %p47 = scmp.eq.s32.totalorder %s9, 1
    %p48 = scmp.ne.s32.totalorder %s43, %s45
    %p49 = scmp.eq.s32.totalorder %s9, 0
    %p50 = por %p48, %p49
    %p51 = scmp.ne.s32.totalorder %s43, %s45
    %p52 = scmp.eq.s32.totalorder %s14, 1
    %p53 = por %p51, %p52
    %p54 = scmp.ne.s32.totalorder %s45, %s46
    %p55 = scmp.eq.s32.totalorder %s14, 0
    %p56 = por %p54, %p55
    %p57 = scmp.ne.s32.totalorder %s45, %s46
    %p58 = scmp.eq.s32.totalorder %s15, 1
    %p59 = por %p57, %p58
    %p61 = scmp.ne.s32.totalorder %s46, %s60
    %p62 = scmp.eq.s32.totalorder %s15, 0
    %p63 = por %p61, %p62
    %s65 = sadd.s32 %s64, 1
    %p68 = scmp.eq.s32.totalorder %s9, 1
    %p69 = scmp.ne.s32.totalorder %s64, %s66
    %p70 = scmp.eq.s32.totalorder %s9, 0
    %p71 = por %p69, %p70
    %p72 = scmp.ne.s32.totalorder %s64, %s66
    %p73 = scmp.eq.s32.totalorder %s14, 1
    %p74 = por %p72, %p73
    %p75 = scmp.ne.s32.totalorder %s66, %s67
    %p76 = scmp.eq.s32.totalorder %s14, 0
    %p77 = por %p75, %p76
    %p78 = scmp.ne.s32.totalorder %s66, %s67
    %p79 = scmp.eq.s32.totalorder %s15, 1
    %p80 = por %p78, %p79
    %p82 = scmp.ne.s32.totalorder %s67, %s81
    %p83 = scmp.eq.s32.totalorder %s15, 0
    %p84 = por %p82, %p83
    %s85 = ssub.s32 %s9, %s16
    %p86 = scmp.eq.s32.totalorder %s85, 0
    %s88 = sadd.s32 %s87, 1
    %s89 = scalar_select %p86, %s87, %s88
    %p92 = pneg %p86
    %p93 = scmp.eq.s32.totalorder %s9, 1
    %p94 = por %p92, %p93
    %p95 = scmp.ne.s32.totalorder %s87, %s90
    %p96 = scmp.eq.s32.totalorder %s9, 0
    %p97 = por %p95, %p96
    %p98 = scmp.ne.s32.totalorder %s87, %s90
    %p99 = scmp.eq.s32.totalorder %s14, 1
    %p100 = por %p98, %p99
    %p101 = scmp.ne.s32.totalorder %s90, %s91
    %p102 = scmp.eq.s32.totalorder %s14, 0
    %p103 = por %p101, %p102
    %p104 = scmp.ne.s32.totalorder %s90, %s91
    %p105 = scmp.eq.s32.totalorder %s15, 1
    %p106 = por %p104, %p105
    %p108 = scmp.ne.s32.totalorder %s91, %s107
    %p109 = scmp.eq.s32.totalorder %s15, 0
    %p110 = por %p108, %p109
    %p111 = scmp.le.s32.totalorder 1, %s9
    %p112 = scmp.lt.s32.totalorder %s9, 3
    %p113 = pnand %p111, %p112
    %p114 = pneg %p113
    // Predicated region
    $region9: #{se_deconv_block_forward.1} parent=5 // pred_check
      _
    $region10: #{se_deconv_block_forward.1} parent=5 // pred_check_branch
      %116 = sbr.rel (%p113) target = $region12
    $region11: #{se_deconv_block_forward.1} parent=5 // pred_region
      %s117 = ssub.s32 %s9, 1
      // Predicated region
      $region13: #{se_deconv_block_forward.1} parent=11 // pred_check
        %p118 = pneg %p56
      $region14: #{se_deconv_block_forward.1} parent=11 // pred_check_branch
        %120 = sbr.rel (%p118) target = $region16
      $region15: #{se_deconv_block_forward.1} parent=11 // pred_region
        _
      $region16: #{se_deconv_block_forward.1} parent=11 // pred_fallthru
        _
      // Predicated region
      $region17: #{se_deconv_block_forward.1} parent=11 // pred_check
        %p121 = pneg %p77
      $region18: #{se_deconv_block_forward.1} parent=11 // pred_check_branch
        %123 = sbr.rel (%p121) target = $region20
      $region19: #{se_deconv_block_forward.1} parent=11 // pred_region
        _
      $region20: #{se_deconv_block_forward.1} parent=11 // pred_fallthru
        _
    $region12: #{se_deconv_block_forward.1} parent=5 // pred_fallthru
      _
    %p124 = scmp.lt.s32.totalorder %s9, 2
    // Predicated region
    $region21: #{se_deconv_block_forward.1} parent=5 // pred_check
      %p125 = pneg %p124
    $region22: #{se_deconv_block_forward.1} parent=5 // pred_check_branch
      %127 = sbr.rel (%p125) target = $region24
    $region23: #{se_deconv_block_forward.1} parent=5 // pred_region
      // Predicated region
      $region25: #{se_deconv_block_forward.1} parent=23 // pred_check
        %p128 = pneg %p29
      $region26: #{se_deconv_block_forward.1} parent=23 // pred_check_branch
        %130 = sbr.rel (%p128) target = $region28
      $region27: #{se_deconv_block_forward.1} parent=23 // pred_region
        %p131 = scmp.lt.s32.totalorder %s9, 1
        %s132 = scalar_select %p131, %s9, 1
        %s133 = smul.addr %s132, 64
        %s134 = smul.addr %s133, 4
        %s135 = scalar_lea.vmem %s0, %s134
      $region28: #{se_deconv_block_forward.1} parent=23 // pred_fallthru
        _
    $region24: #{se_deconv_block_forward.1} parent=5 // pred_fallthru
      _
    %p136 = scmp.le.s32.totalorder 1, %s9
    %p137 = scmp.lt.s32.totalorder %s9, 3
    %p138 = pnand %p136, %p137
    %p139 = pneg %p138
    // Predicated region
    $region29: #{se_deconv_block_forward.1} parent=5 // pred_check
      _
    $region30: #{se_deconv_block_forward.1} parent=5 // pred_check_branch
      %141 = sbr.rel (%p138) target = $region32
    $region31: #{se_deconv_block_forward.1} parent=5 // pred_region
      %s142 = ssub.s32 %s9, 1
      %p143 = scmp.lt.s32.totalorder %s14, 1
      %s144 = scalar_select %p143, %s14, 1
      %s145 = smul.addr %s144, 64
      %s146 = smul.addr %s145, 4
      %s147 = scalar_lea.vmem %s0, %s146
      %p148 = pneg %p35
      %p149 = pneg %p32
      %p150 = pneg %p56
      %p151 = pneg %p53
      %p152 = pneg %p77
      %p153 = pneg %p74
      %p154 = pneg %p103
      %p155 = pneg %p100
      %p156 = scmp.lt.s32.totalorder %s14, 1
      %s157 = scalar_select %p156, %s14, 1
      %s158 = smul.addr %s157, 8
      %s159 = smul.addr %s158, 8
      %s160 = scalar_lea.vmem %s3, %s159
      %p161 = scmp.lt.s32.totalorder %s14, 1
      %s162 = scalar_select %p161, %s14, 1
      %s163 = smul.addr %s162, 64
      %s164 = smul.addr %s163, 4
      %s165 = scalar_lea.vmem %s0, %s164
      %p166 = scmp.lt.s32.totalorder %s14, 1
      %s167 = scalar_select %p166, %s14, 1
      %s168 = smul.addr %s167, 8
      %s169 = smul.addr %s168, 8
      %s170 = scalar_lea.vmem %s3, %s169
      %v172 = vld [vmem:[%s1] sm:$0xf]
      %v173 = vld [vmem:[%s165] sm:$0xff]
      %v174 = vld [vmem:[%s165 + $0x8] sm:$0xff]
      %v175 = vld [vmem:[%s165 + $0x10] sm:$0xff]
      %v176 = vld [vmem:[%s165 + $0x18] sm:$0xff]
      %v177 = vld [vmem:[%s165 + $0x20] sm:$0xff]
      %v178 = vld [vmem:[%s165 + $0x28] sm:$0xff]
      %v179 = vld [vmem:[%s165 + $0x30] sm:$0xff]
      %v180 = vld [vmem:[%s165 + $0x38] sm:$0xff]
      %v181 = vld [vmem:[%s165 + $0x40] sm:$0xff]
      %v182 = vld [vmem:[%s165 + $0x48] sm:$0xff]
      %v183 = vld [vmem:[%s165 + $0x50] sm:$0xff]
      %v184 = vld [vmem:[%s165 + $0x58] sm:$0xff]
      %v185 = vld [vmem:[%s165 + $0x60] sm:$0xff]
      %v186 = vld [vmem:[%s165 + $0x68] sm:$0xff]
      %v187 = vld [vmem:[%s165 + $0x70] sm:$0xff]
      %v188 = vld [vmem:[%s165 + $0x78] sm:$0xff]
      %v189 = vld [vmem:[%s165 + $0x80] sm:$0xff]
      %v190 = vld [vmem:[%s165 + $0x88] sm:$0xff]
      %v191 = vld [vmem:[%s165 + $0x90] sm:$0xff]
      %v192 = vld [vmem:[%s165 + $0x98] sm:$0xff]
      %v193 = vld [vmem:[%s165 + $0xa0] sm:$0xff]
      %v194 = vld [vmem:[%s165 + $0xa8] sm:$0xff]
      %v195 = vld [vmem:[%s165 + $0xb0] sm:$0xff]
      %v196 = vld [vmem:[%s165 + $0xb8] sm:$0xff]
      %v197 = vld [vmem:[%s165 + $0xc0] sm:$0xff]
      %v198 = vld [vmem:[%s165 + $0xc8] sm:$0xff]
      %v199 = vld [vmem:[%s165 + $0xd0] sm:$0xff]
      %v200 = vld [vmem:[%s165 + $0xd8] sm:$0xff]
      %v201 = vld [vmem:[%s165 + $0xe0] sm:$0xff]
      %v202 = vld [vmem:[%s165 + $0xe8] sm:$0xff]
      %v203 = vld [vmem:[%s165 + $0xf0] sm:$0xff]
      %v204 = vld [vmem:[%s165 + $0xf8] sm:$0xff]
      %v205 = vld [vmem:[%s2] sm:$0xff]
      %207 = vset.pattern.permute.xlu0 0
      %208 = vperm.xlu0 %207, %v205
      %v209 = vpop.permute.xlu0 %208
      %v243 = vunpack.c.l.b16 %v173
      %v244 = vunpack.c.h.b16 %v173
      %v245 = vunpack.c.l.b16 %v174
      %v246 = vunpack.c.h.b16 %v174
      %v247 = vunpack.c.l.b16 %v175
      %v248 = vunpack.c.h.b16 %v175
      %v249 = vunpack.c.l.b16 %v176
      %v250 = vunpack.c.h.b16 %v176
      %v251 = vunpack.c.l.b16 %v177
      %v252 = vunpack.c.h.b16 %v177
      %v253 = vunpack.c.l.b16 %v178
      %v254 = vunpack.c.h.b16 %v178
      %v255 = vunpack.c.l.b16 %v179
      %v256 = vunpack.c.h.b16 %v179
      %v257 = vunpack.c.l.b16 %v180
      %v258 = vunpack.c.h.b16 %v180
      %v259 = vunpack.c.l.b16 %v181
      %v260 = vunpack.c.h.b16 %v181
      %v261 = vunpack.c.l.b16 %v182
      %v262 = vunpack.c.h.b16 %v182
      %v263 = vunpack.c.l.b16 %v183
      %v264 = vunpack.c.h.b16 %v183
      %v265 = vunpack.c.l.b16 %v184
      %v266 = vunpack.c.h.b16 %v184
      %v267 = vunpack.c.l.b16 %v185
      %v268 = vunpack.c.h.b16 %v185
      %v269 = vunpack.c.l.b16 %v186
      %v270 = vunpack.c.h.b16 %v186
      %v271 = vunpack.c.l.b16 %v187
      %v272 = vunpack.c.h.b16 %v187
      %v273 = vunpack.c.l.b16 %v188
      %v274 = vunpack.c.h.b16 %v188
      %v275 = vunpack.c.l.b16 %v189
      %v276 = vunpack.c.h.b16 %v189
      %v277 = vunpack.c.l.b16 %v190
      %v278 = vunpack.c.h.b16 %v190
      %v279 = vunpack.c.l.b16 %v191
      %v280 = vunpack.c.h.b16 %v191
      %v281 = vunpack.c.l.b16 %v192
      %v282 = vunpack.c.h.b16 %v192
      %v283 = vunpack.c.l.b16 %v193
      %v284 = vunpack.c.h.b16 %v193
      %v285 = vunpack.c.l.b16 %v194
      %v286 = vunpack.c.h.b16 %v194
      %v287 = vunpack.c.l.b16 %v195
      %v288 = vunpack.c.h.b16 %v195
      %v289 = vunpack.c.l.b16 %v196
      %v290 = vunpack.c.h.b16 %v196
      %v291 = vunpack.c.l.b16 %v197
      %v292 = vunpack.c.h.b16 %v197
      %v293 = vunpack.c.l.b16 %v198
      %v294 = vunpack.c.h.b16 %v198
      %v295 = vunpack.c.l.b16 %v199
      %v296 = vunpack.c.h.b16 %v199
      %v297 = vunpack.c.l.b16 %v200
      %v298 = vunpack.c.h.b16 %v200
      %v299 = vunpack.c.l.b16 %v201
      %v300 = vunpack.c.h.b16 %v201
      %v301 = vunpack.c.l.b16 %v202
      %v302 = vunpack.c.h.b16 %v202
      %v303 = vunpack.c.l.b16 %v203
      %v304 = vunpack.c.h.b16 %v203
      %v305 = vunpack.c.l.b16 %v204
      %v306 = vunpack.c.h.b16 %v204
      %v307 = vpack.c.b16 %v251, %v243
      %v308 = vpack.c.b16 %v252, %v244
      %v309 = vpack.c.b16 %v253, %v245
      %v310 = vpack.c.b16 %v254, %v246
      %v311 = vpack.c.b16 %v255, %v247
      %v312 = vpack.c.b16 %v256, %v248
      %v313 = vpack.c.b16 %v257, %v249
      %v314 = vpack.c.b16 %v258, %v250
      %v315 = vpack.c.b16 %v267, %v259
      %v316 = vpack.c.b16 %v268, %v260
      %v317 = vpack.c.b16 %v269, %v261
      %v318 = vpack.c.b16 %v270, %v262
      %v319 = vpack.c.b16 %v271, %v263
      %v320 = vpack.c.b16 %v272, %v264
      %v321 = vpack.c.b16 %v273, %v265
      %v322 = vpack.c.b16 %v274, %v266
      %v323 = vpack.c.b16 %v283, %v275
      %v324 = vpack.c.b16 %v284, %v276
      %v325 = vpack.c.b16 %v285, %v277
      %v326 = vpack.c.b16 %v286, %v278
      %v327 = vpack.c.b16 %v287, %v279
      %v328 = vpack.c.b16 %v288, %v280
      %v329 = vpack.c.b16 %v289, %v281
      %v330 = vpack.c.b16 %v290, %v282
      %v331 = vpack.c.b16 %v299, %v291
      %v332 = vpack.c.b16 %v300, %v292
      %v333 = vpack.c.b16 %v301, %v293
      %v334 = vpack.c.b16 %v302, %v294
      %v335 = vpack.c.b16 %v303, %v295
      %v336 = vpack.c.b16 %v304, %v296
      %v337 = vpack.c.b16 %v305, %v297
      %v338 = vpack.c.b16 %v306, %v298
      %vm371 = vcmask 523264
      %v373 = vsel %vm371, %v172, 0
      %375 = vmatprep.subr.bf16.mxu0 %v308
      %376 = vmatpush1.bf16.msra.mxu0 %v307
      %377 = vmatprep.subr.bf16.mxu0 %v316
      %378 = vmatpush1.bf16.msra.mxu0 %v315
      %379 = vmatprep.subr.bf16.mxu0 %v324
      %380 = vmatpush1.bf16.msra.mxu0 %v323
      %381 = vmatprep.subr.bf16.mxu0 %v332
      %382 = vmatpush1.bf16.msra.mxu0 %v331
      %383 = vmatprep.subr.bf16.mxu0 0
      %384 = vmatpush1.bf16.msra.mxu0 0
      %385 = vmatprep.subr.bf16.mxu0 0
      %386 = vmatpush1.bf16.msra.mxu0 0
      %387 = vmatprep.subr.bf16.mxu0 0
      %388 = vmatpush1.bf16.msra.mxu0 0
      %389 = vmatprep.subr.bf16.mxu0 0
      %390 = vmatpush1.bf16.msra.mxu0 0
      %391 = vmatprep.subr.bf16.mxu0 0
      %392 = vmatpush1.bf16.msra.mxu0 0
      %393 = vmatprep.subr.bf16.mxu0 0
      %394 = vmatpush1.bf16.msra.mxu0 0
      %395 = vmatprep.subr.bf16.mxu0 0
      %396 = vmatpush1.bf16.msra.mxu0 0
      %397 = vmatprep.subr.bf16.mxu0 0
      %398 = vmatpush1.bf16.msra.mxu0 0
      %399 = vmatprep.subr.bf16.mxu0 0
      %400 = vmatpush1.bf16.msra.mxu0 0
      %401 = vmatprep.subr.bf16.mxu0 0
      %402 = vmatpush1.bf16.msra.mxu0 0
      %403 = vmatprep.subr.bf16.mxu0 0
      %404 = vmatpush1.bf16.msra.mxu0 0
      %405 = vmatprep.subr.bf16.mxu0 0
      %406 = vmatpush1.bf16.msra.mxu0 0
      %407 = vmatprep.mubr.bf16.mxu0 0
      %408 = vmatmul.mubr.bf16.gmra.mrb[0].mxu0 %v373
      %v409 = vpop.f32.mrb[0].mxu0
      %v410 = vadd.f32 %v209, %v409
      %v411 = vpop.f32.mrb[0].mxu0
      %v412 = vadd.f32 %v209, %v411
      %v413 = vpop.f32.mrb[0].mxu0
      %v414 = vpop.f32.mrb[0].mxu0
      %415 = vdwg.mxu0
      %416 = vmatprep.subr.bf16.mxu0 %v310
      %417 = vmatpush1.bf16.msra.mxu0 %v309
      %418 = vmatprep.subr.bf16.mxu0 %v318
      %419 = vmatpush1.bf16.msra.mxu0 %v317
      %420 = vmatprep.subr.bf16.mxu0 %v326
      %421 = vmatpush1.bf16.msra.mxu0 %v325
      %422 = vmatprep.subr.bf16.mxu0 %v334
      %423 = vmatpush1.bf16.msra.mxu0 %v333
      %424 = vmatprep.subr.bf16.mxu0 0
      %425 = vmatpush1.bf16.msra.mxu0 0
      %426 = vmatprep.subr.bf16.mxu0 0
      %427 = vmatpush1.bf16.msra.mxu0 0
      %428 = vmatprep.subr.bf16.mxu0 0
      %429 = vmatpush1.bf16.msra.mxu0 0
      %430 = vmatprep.subr.bf16.mxu0 0
      %431 = vmatpush1.bf16.msra.mxu0 0
      %432 = vmatprep.subr.bf16.mxu0 0
      %433 = vmatpush1.bf16.msra.mxu0 0
      %434 = vmatprep.subr.bf16.mxu0 0
      %435 = vmatpush1.bf16.msra.mxu0 0
      %436 = vmatprep.subr.bf16.mxu0 0
      %437 = vmatpush1.bf16.msra.mxu0 0
      %438 = vmatprep.subr.bf16.mxu0 0
      %439 = vmatpush1.bf16.msra.mxu0 0
      %440 = vmatprep.subr.bf16.mxu0 0
      %441 = vmatpush1.bf16.msra.mxu0 0
      %442 = vmatprep.subr.bf16.mxu0 0
      %443 = vmatpush1.bf16.msra.mxu0 0
      %444 = vmatprep.subr.bf16.mxu0 0
      %445 = vmatpush1.bf16.msra.mxu0 0
      %446 = vmatprep.subr.bf16.mxu0 0
      %447 = vmatpush1.bf16.msra.mxu0 0
      %448 = vmatprep.mubr.bf16.mxu0 0
      %449 = vmatmul.mubr.bf16.gmra.mrb[0].mxu0 %v373
      %v450 = vpop.f32.mrb[0].mxu0
      %v451 = vadd.f32 %v209, %v450
      %v452 = vpop.f32.mrb[0].mxu0
      %v453 = vadd.f32 %v209, %v452
      %v454 = vpop.f32.mrb[0].mxu0
      %v455 = vpop.f32.mrb[0].mxu0
      %456 = vdwg.mxu0
      %457 = vmatprep.subr.bf16.mxu0 %v312
      %458 = vmatpush1.bf16.msra.mxu0 %v311
      %459 = vmatprep.subr.bf16.mxu0 %v320
      %460 = vmatpush1.bf16.msra.mxu0 %v319
      %461 = vmatprep.subr.bf16.mxu0 %v328
      %462 = vmatpush1.bf16.msra.mxu0 %v327
      %463 = vmatprep.subr.bf16.mxu0 %v336
      %464 = vmatpush1.bf16.msra.mxu0 %v335
      %465 = vmatprep.subr.bf16.mxu0 0
      %466 = vmatpush1.bf16.msra.mxu0 0
      %467 = vmatprep.subr.bf16.mxu0 0
      %468 = vmatpush1.bf16.msra.mxu0 0
      %469 = vmatprep.subr.bf16.mxu0 0
      %470 = vmatpush1.bf16.msra.mxu0 0
      %471 = vmatprep.subr.bf16.mxu0 0
      %472 = vmatpush1.bf16.msra.mxu0 0
      %473 = vmatprep.subr.bf16.mxu0 0
      %474 = vmatpush1.bf16.msra.mxu0 0
      %475 = vmatprep.subr.bf16.mxu0 0
      %476 = vmatpush1.bf16.msra.mxu0 0
      %477 = vmatprep.subr.bf16.mxu0 0
      %478 = vmatpush1.bf16.msra.mxu0 0
      %479 = vmatprep.subr.bf16.mxu0 0
      %480 = vmatpush1.bf16.msra.mxu0 0
      %481 = vmatprep.subr.bf16.mxu0 0
      %482 = vmatpush1.bf16.msra.mxu0 0
      %483 = vmatprep.subr.bf16.mxu0 0
      %484 = vmatpush1.bf16.msra.mxu0 0
      %485 = vmatprep.subr.bf16.mxu0 0
      %486 = vmatpush1.bf16.msra.mxu0 0
      %487 = vmatprep.subr.bf16.mxu0 0
      %488 = vmatpush1.bf16.msra.mxu0 0
      %489 = vmatprep.mubr.bf16.mxu0 0
      %490 = vmatmul.mubr.bf16.gmra.mrb[0].mxu0 %v373
      %v491 = vpop.f32.mrb[0].mxu0
      %v492 = vadd.f32 %v209, %v491
      %v493 = vpop.f32.mrb[0].mxu0
      %v494 = vadd.f32 %v209, %v493
      %v495 = vpop.f32.mrb[0].mxu0
      %v496 = vpop.f32.mrb[0].mxu0
      %497 = vdwg.mxu0
      %498 = vmatprep.subr.bf16.mxu0 %v314
      %499 = vmatpush1.bf16.msra.mxu0 %v313
      %500 = vmatprep.subr.bf16.mxu0 %v322
      %501 = vmatpush1.bf16.msra.mxu0 %v321
      %502 = vmatprep.subr.bf16.mxu0 %v330
      %503 = vmatpush1.bf16.msra.mxu0 %v329
      %504 = vmatprep.subr.bf16.mxu0 %v338
      %505 = vmatpush1.bf16.msra.mxu0 %v337
      %506 = vmatprep.subr.bf16.mxu0 0
      %507 = vmatpush1.bf16.msra.mxu0 0
      %508 = vmatprep.subr.bf16.mxu0 0
      %509 = vmatpush1.bf16.msra.mxu0 0
      %510 = vmatprep.subr.bf16.mxu0 0
      %511 = vmatpush1.bf16.msra.mxu0 0
      %512 = vmatprep.subr.bf16.mxu0 0
      %513 = vmatpush1.bf16.msra.mxu0 0
      %514 = vmatprep.subr.bf16.mxu0 0
      %515 = vmatpush1.bf16.msra.mxu0 0
      %516 = vmatprep.subr.bf16.mxu0 0
      %517 = vmatpush1.bf16.msra.mxu0 0
      %518 = vmatprep.subr.bf16.mxu0 0
      %519 = vmatpush1.bf16.msra.mxu0 0
      %520 = vmatprep.subr.bf16.mxu0 0
      %521 = vmatpush1.bf16.msra.mxu0 0
      %522 = vmatprep.subr.bf16.mxu0 0
      %523 = vmatpush1.bf16.msra.mxu0 0
      %524 = vmatprep.subr.bf16.mxu0 0
      %525 = vmatpush1.bf16.msra.mxu0 0
      %526 = vmatprep.subr.bf16.mxu0 0
      %527 = vmatpush1.bf16.msra.mxu0 0
      %528 = vmatprep.subr.bf16.mxu0 0
      %529 = vmatpush1.bf16.msra.mxu0 0
      %530 = vmatprep.mubr.bf16.mxu0 0
      %531 = vmatmul.mubr.bf16.gmra.mrb[0].mxu0 %v373
      %v532 = vpop.f32.mrb[0].mxu0
      %v533 = vadd.f32 %v209, %v532
      %v534 = vpop.f32.mrb[0].mxu0
      %v535 = vadd.f32 %v209, %v534
      %v536 = vpop.f32.mrb[0].mxu0
      %v537 = vpop.f32.mrb[0].mxu0
      %538 = vdwg.mxu0
      %v539 = vmin.f32 %v410, 0.0
      %v540 = vmin.f32 %v412, 0.0
      %v541 = vmin.f32 %v451, 0.0
      %v542 = vmin.f32 %v453, 0.0
      %v543 = vmin.f32 %v492, 0.0
      %v544 = vmin.f32 %v494, 0.0
      %v545 = vmin.f32 %v533, 0.0
      %v546 = vmin.f32 %v535, 0.0
      %v547 = vmul.f32 %v539, 1.442695
      %v548 = vpow.pop %v547
      %v549 = vmul.f32 %v540, 1.442695
      %v550 = vpow.pop %v549
      %v551 = vmul.f32 %v541, 1.442695
      %v552 = vpow.pop %v551
      %v553 = vmul.f32 %v542, 1.442695
      %v554 = vpow.pop %v553
      %v555 = vmul.f32 %v543, 1.442695
      %v556 = vpow.pop %v555
      %v557 = vmul.f32 %v544, 1.442695
      %v558 = vpow.pop %v557
      %v559 = vmul.f32 %v545, 1.442695
      %v560 = vpow.pop %v559
      %v561 = vmul.f32 %v546, 1.442695
      %v562 = vpow.pop %v561
      %v563 = vsub.f32 %v548, 1.0
      %v564 = vsub.f32 %v550, 1.0
      %v565 = vsub.f32 %v552, 1.0
      %v566 = vsub.f32 %v554, 1.0
      %v567 = vsub.f32 %v556, 1.0
      %v568 = vsub.f32 %v558, 1.0
      %v569 = vsub.f32 %v560, 1.0
      %v570 = vsub.f32 %v562, 1.0
      %vm571 = vcmp.gt.f32.partialorder %v410, 0.0
      %vm572 = vcmp.gt.f32.partialorder %v412, 0.0
      %vm573 = vcmp.gt.f32.partialorder %v451, 0.0
      %vm574 = vcmp.gt.f32.partialorder %v453, 0.0
      %vm575 = vcmp.gt.f32.partialorder %v492, 0.0
      %vm576 = vcmp.gt.f32.partialorder %v494, 0.0
      %vm577 = vcmp.gt.f32.partialorder %v533, 0.0
      %vm578 = vcmp.gt.f32.partialorder %v535, 0.0
      %v579 = vsel %vm571, %v410, %v563
      %v580 = vsel %vm572, %v412, %v564
      %v581 = vsel %vm573, %v451, %v565
      %v582 = vsel %vm574, %v453, %v566
      %v583 = vsel %vm575, %v492, %v567
      %v584 = vsel %vm576, %v494, %v568
      %v585 = vsel %vm577, %v533, %v569
      %v586 = vsel %vm578, %v535, %v570
      %587 = vst [vmem:[%s170] sm:$0xff] %v579
      %588 = vst [vmem:[%s170 + $0x8] sm:$0xff] %v580
      %589 = vst [vmem:[%s170 + $0x10] sm:$0xff] %v581
      %590 = vst [vmem:[%s170 + $0x18] sm:$0xff] %v582
      %591 = vst [vmem:[%s170 + $0x20] sm:$0xff] %v583
      %592 = vst [vmem:[%s170 + $0x28] sm:$0xff] %v584
      %593 = vst [vmem:[%s170 + $0x30] sm:$0xff] %v585
      %594 = vst [vmem:[%s170 + $0x38] sm:$0xff] %v586
      %p595 = scmp.lt.s32.totalorder %s14, 1
      %s596 = scalar_select %p595, %s14, 1
      %s597 = smul.addr %s596, 8
      %s598 = smul.addr %s597, 8
      %s599 = scalar_lea.vmem %s3, %s598
      // Predicated region
      $region33: #{se_deconv_block_forward.1} parent=31 // pred_check
        %p600 = pneg %p100
      $region34: #{se_deconv_block_forward.1} parent=31 // pred_check_branch
        %602 = sbr.rel (%p600) target = $region36
      $region35: #{se_deconv_block_forward.1} parent=31 // pred_region
        _
      $region36: #{se_deconv_block_forward.1} parent=31 // pred_fallthru
        _
    $region32: #{se_deconv_block_forward.1} parent=5 // pred_fallthru
      _
    %p603 = scmp.le.s32.totalorder 2, %s9
    // Predicated region
    $region37: #{se_deconv_block_forward.1} parent=5 // pred_check
      %p604 = pneg %p603
    $region38: #{se_deconv_block_forward.1} parent=5 // pred_check_branch
      %606 = sbr.rel (%p604) target = $region40
    $region39: #{se_deconv_block_forward.1} parent=5 // pred_region
      %s607 = ssub.s32 %s9, 2
      // Predicated region
      $region41: #{se_deconv_block_forward.1} parent=39 // pred_check
        %p608 = pneg %p106
      $region42: #{se_deconv_block_forward.1} parent=39 // pred_check_branch
        %610 = sbr.rel (%p608) target = $region44
      $region43: #{se_deconv_block_forward.1} parent=39 // pred_region
        %p611 = scmp.lt.s32.totalorder %s15, 1
        %s612 = scalar_select %p611, %s15, 1
        %s613 = smul.addr %s612, 8
        %s614 = smul.addr %s613, 8
        %s615 = scalar_lea.vmem %s3, %s614
      $region44: #{se_deconv_block_forward.1} parent=39 // pred_fallthru
        _
    $region40: #{se_deconv_block_forward.1} parent=5 // pred_fallthru
      _
  $region6: #{se_deconv_block_forward.1} parent=0 // loop_footer
    %s13 = sadd.s32 1, %s9
  $region7: #{se_deconv_block_forward.1} parent=0 // loop_footer_branch
    %8 = sbr.rel target = $region3
  $region8: #{se_deconv_block_forward.1} parent=0 // loop_exit
    _

</llo_original>
